<compile_context>
chip_gen: v5e
topology: v5e:2x2
jax: 0.10.0
libtpu: 0.0.40
codegen_flags: <defaults>
</compile_context>

<pallas_src>
import functools

import jax
import jax.numpy as jnp
from jax.experimental import pallas as pl
from jax.experimental.pallas import tpu as pltpu


def _round_up(x, m):
    return ((x + m - 1) // m) * m


def _vmem_capacity_bytes():
    """Per-core VMEM capacity; conservative (v7x, 64 MiB) fallback."""
    try:
        info = pltpu.get_tpu_info()
        for attr in ("vmem_capacity_bytes", "vmem_bytes", "vmem_size_bytes"):
            v = getattr(info, attr, None)
            if v:
                return int(v)
    except Exception:
        pass
    return 64 << 20


def _fast_rcnn_kernel(x_ref, w_ref, b_ref, scores_ref, deltas_ref, acc_ref, *,
                      n_cls, nc_p, n_box, compute_dtype):
    """One fused (cls + bbox) matmul tile with optional K reduction axis."""
    k = pl.program_id(1)

    @pl.when(k == 0)
    def _init():
        acc_ref[...] = jnp.zeros_like(acc_ref)

    # Cast x in-kernel (the f32 tile is streamed straight from HBM; no
    # separate wrapper-side cast pass over x).
    x = x_ref[...].astype(compute_dtype)
    acc_ref[...] += jnp.dot(x, w_ref[...], preferred_element_type=jnp.float32)

    @pl.when(k == pl.num_programs(1) - 1)
    def _finalize():
        acc = acc_ref[...] + b_ref[...]          # bias add in f32
        scores_ref[...] = acc[:, :n_cls].astype(scores_ref.dtype)
        deltas_ref[...] = acc[:, nc_p:nc_p + n_box].astype(deltas_ref.dtype)


def make_fast_rcnn_forward(w_cls, b_cls, w_bbox, b_bbox, *,
                           tile_m=512,
                           compute_dtype=jnp.bfloat16,
                           out_dtype=jnp.float32):
    """Builds the fused FastRCNNOutputLayers forward.

    Weights are expected transposed w.r.t. nn.Linear: (in_features, out_features),
    with in_features ordering matching torch.flatten(x, 1) of NCHW input (a
    silently NHWC-flattened or un-transposed weight would produce plausible but
    wrong outputs).  Pass compute_dtype=jnp.float32 for strict f32 parity with
    PyTorch; bf16 (default) uses the MXU's fast path with f32 accumulation.
    """
    D = int(w_cls.shape[0])
    n_cls = int(w_cls.shape[1])
    n_box = int(w_bbox.shape[1])
    assert int(w_bbox.shape[0]) == D, "cls/bbox heads must share in_features"
    assert b_cls.shape == (n_cls,) and b_bbox.shape == (n_box,)

    nc_p = _round_up(n_cls, 128)
    nb_p = _round_up(n_box, 128)
    out_p = nc_p + nb_p                       # fused, 128-aligned per head

    # One-time pad + concat along the output (lane) dimension (hoisted here,
    # not in the per-call path).
    w_fused = jnp.zeros((D, out_p), jnp.float32)
    w_fused = w_fused.at[:, :n_cls].set(w_cls.astype(jnp.float32))
    w_fused = w_fused.at[:, nc_p:nc_p + n_box].set(w_bbox.astype(jnp.float32))
    w_fused = w_fused.astype(compute_dtype)

    b_fused = jnp.zeros((1, out_p), jnp.float32)
    b_fused = b_fused.at[0, :n_cls].set(b_cls.astype(jnp.float32))
    b_fused = b_fused.at[0, nc_p:nc_p + n_box].set(b_bbox.astype(jnp.float32))

    csize = jnp.dtype(compute_dtype).itemsize
    out_isz = jnp.dtype(out_dtype).itemsize
    vmem_cap = _vmem_capacity_bytes()

    kernel = functools.partial(_fast_rcnn_kernel, n_cls=n_cls, nc_p=nc_p,
                               n_box=n_box, compute_dtype=compute_dtype)

    @jax.jit
    def forward(x):
        if x.ndim > 2:
            x = x.reshape(x.shape[0], -1)     # torch.flatten(x, start_dim=1)
        N = int(x.shape[0])
        assert x.shape[1] == D, f"expected flattened dim {D}, got {x.shape[1]}"
        x_isz = jnp.dtype(x.dtype).itemsize

        # --- Row tiling: bound padding to <=7 rows; ensure >=2 grid steps for
        # mid/large N so both v7x TensorCores get work.
        tm = min(tile_m, _round_up(N, 8))
        if N >= 16:
            tm = min(tm, _round_up(pl.cdiv(N, 2), 8))
        tm = max(tm, 8)

        # --- K tiling: stream the weight over K when resident weight + x
        # tiles would crowd per-core VMEM (mainly large-D heads on v7x).
        def footprint(tk, wbufs, tm_):
            return (wbufs * tk * out_p * csize          # weight buffer(s)
                    + 2 * tm_ * tk * x_isz              # x tiles (double-buf)
                    + tm_ * out_p * 4                   # f32 accumulator
                    + 2 * out_p * 4                     # bias
                    + 2 * tm_ * (nc_p + nb_p) * out_isz)  # output buffers

        budget = vmem_cap // 2
        tk = D
        if footprint(D, 1, tm) > budget:
            for cand in (4096, 2048, 1024, 512, 256, 128):
                if cand < D and D % cand == 0 and footprint(cand, 2, tm) <= budget:
                    tk = cand
                    break
        k_tiles = D // tk if (tk < D and D % tk == 0) else 1
        if k_tiles > 1:
            tm = min(tm, 256)                 # large-D head: modest row tile
        grid_m = pl.cdiv(N, tm)

        # --- Generation-aware VMEM limit (<= ~60% of physical per-core VMEM).
        wbufs = 1 if k_tiles == 1 else 2
        vmem_est = footprint(tk, wbufs, tm)
        vmem_limit = int(min(max(2 * vmem_est, 32 << 20), (vmem_cap * 3) // 5))

        cost = pl.CostEstimate(
            flops=2 * N * D * out_p,
            transcendentals=0,
            bytes_accessed=(N * D * x_isz + D * out_p * csize + out_p * 4
                            + N * (n_cls + n_box) * out_isz))

        w_mode = pl.Buffered(1) if k_tiles == 1 else pl.Buffered(2)

        scores, deltas = pl.pallas_call(
            kernel,
            out_shape=(
                jax.ShapeDtypeStruct((N, n_cls), out_dtype),
                jax.ShapeDtypeStruct((N, n_box), out_dtype),
            ),
            grid=(grid_m, k_tiles),
            in_specs=[
                # x tiles stream (f32, cast in kernel).
                pl.BlockSpec((tm, tk), lambda i, k: (i, k)),
                # Fused weight: resident (single-buffered) unless K-tiled.
                pl.BlockSpec((tk, out_p), lambda i, k: (k, 0),
                             pipeline_mode=w_mode),
                # Bias: tiny, resident, single-buffered.
                pl.BlockSpec((1, out_p), lambda i, k: (0, 0),
                             pipeline_mode=pl.Buffered(1)),
            ],
            out_specs=(
                pl.BlockSpec((tm, n_cls), lambda i, k: (i, 0)),
                pl.BlockSpec((tm, n_box), lambda i, k: (i, 0)),
            ),
            scratch_shapes=[pltpu.VMEM((tm, out_p), jnp.float32)],
            compiler_params=pltpu.CompilerParams(
                dimension_semantics=("parallel", "arbitrary"),
                vmem_limit_bytes=vmem_limit),
            cost_estimate=cost,
        )(x, w_fused, b_fused)

        return scores, deltas

    return forward


if __name__ == "__main__":
    # Module config (small, matching FastRCNNOutputLayers.__init__ semantics).
    num_classes = 8
    box_dim = 4
    cls_agnostic_bbox_reg = False
    num_bbox_reg_classes = 1 if cls_agnostic_bbox_reg else num_classes

    # Input: roi-pooled features, NCHW (2, 4, 16, 16) -> flattened D = 1024.
    N, C, H, W = 2, 4, 16, 16
    D = C * H * W

    key = jax.random.PRNGKey(0)
    kx, kwc, kwb = jax.random.split(key, 3)

    x = jax.random.normal(kx, (N, C, H, W), dtype=jnp.float32)

    # Deterministic params mirroring nn.init.normal_(std=...) / zero bias.
    # Stored transposed: (in_features, out_features).
    w_cls = 0.01 * jax.random.normal(kwc, (D, num_classes + 1), dtype=jnp.float32)
    b_cls = jnp.zeros((num_classes + 1,), dtype=jnp.float32)
    w_bbox = 0.001 * jax.random.normal(
        kwb, (D, num_bbox_reg_classes * box_dim), dtype=jnp.float32)
    b_bbox = jnp.zeros((num_bbox_reg_classes * box_dim,), dtype=jnp.float32)

    forward = make_fast_rcnn_forward(w_cls, b_cls, w_bbox, b_bbox)
    scores, deltas = forward(x)
    jax.block_until_ready((scores, deltas))

    # References: bf16-matched (same compute precision as kernel) + full f32.
    x_flat = x.reshape(N, -1)
    scores_ref_bf16 = jnp.dot(x_flat.astype(jnp.bfloat16), w_cls.astype(jnp.bfloat16),
                              preferred_element_type=jnp.float32) + b_cls
    deltas_ref_bf16 = jnp.dot(x_flat.astype(jnp.bfloat16), w_bbox.astype(jnp.bfloat16),
                              preferred_element_type=jnp.float32) + b_bbox
    scores_ref_f32 = x_flat @ w_cls + b_cls
    deltas_ref_f32 = x_flat @ w_bbox + b_bbox

    assert scores.shape == (N, num_classes + 1)
    assert deltas.shape == (N, num_bbox_reg_classes * box_dim)
    assert jnp.allclose(scores, scores_ref_bf16, atol=1e-3, rtol=1e-2)
    assert jnp.allclose(deltas, deltas_ref_bf16, atol=1e-3, rtol=1e-2)
    assert jnp.allclose(scores, scores_ref_f32, atol=5e-2, rtol=5e-2)
    assert jnp.allclose(deltas, deltas_ref_f32, atol=5e-2, rtol=5e-2)

    print("KERNEL_OK")
</pallas_src>

<mosaic_0001>
module attributes {stable_mosaic.version = 11 : i64} {
  func.func @_fast_rcnn_kernel(%arg0: i32, %arg1: i32, %arg2: memref<8x1024xf32, #tpu.memory_space<vmem>>, %arg3: memref<1024x256xbf16, #tpu.memory_space<vmem>>, %arg4: memref<1x256xf32, #tpu.memory_space<vmem>>, %arg5: memref<8x9xf32, #tpu.memory_space<vmem>>, %arg6: memref<8x32xf32, #tpu.memory_space<vmem>>, %arg7: memref<8x256xf32, #tpu.memory_space<vmem>>) attributes {dimension_semantics = [#tpu.dimension_semantics<parallel>, #tpu.dimension_semantics<arbitrary>], iteration_bounds = array<i64: 1, 1>, scalar_prefetch = 0 : i64, scratch_operands = 1 : i64, tpu.core_type = #tpu.core_type<tc>, window_params = [{transform_indices = @transform_0, window_bounds = array<i64: 8, 1024>}, {pipeline_mode = #tpu.pipeline_mode<synchronous>, transform_indices = @transform_1, window_bounds = array<i64: 1024, 256>}, {pipeline_mode = #tpu.pipeline_mode<synchronous>, transform_indices = @transform_2, window_bounds = array<i64: 1, 256>}, {transform_indices = @transform_3, window_bounds = array<i64: 8, 9>}, {transform_indices = @transform_4, window_bounds = array<i64: 8, 32>}]} {
    %c0_i32 = arith.constant 0 : i32
    %0 = arith.cmpi eq, %arg1, %c0_i32 : i32
    %1 = arith.extui %0 : i1 to i32
    %c0_i32_0 = arith.constant 0 : i32
    %2 = arith.cmpi ne, %1, %c0_i32_0 : i32
    scf.if %2 {
      %cst_10 = arith.constant 0.000000e+00 : f32
      %13 = vector.broadcast %cst_10 : f32 to vector<8x256xf32>
      %c0_11 = arith.constant 0 : index
      %c0_12 = arith.constant 0 : index
      %14 = vector.load %arg7[%c0_11, %c0_12] : memref<8x256xf32, #tpu.memory_space<vmem>>, vector<8x256xf32>
      tpu.vector_store %arg7[%c0_11, %c0_12], %13 {strides = array<i32>} : memref<8x256xf32, #tpu.memory_space<vmem>>, vector<8x256xf32>,
    } else {
    }
    %c0 = arith.constant 0 : index
    %c0_1 = arith.constant 0 : index
    %3 = vector.load %arg2[%c0, %c0_1] : memref<8x1024xf32, #tpu.memory_space<vmem>>, vector<8x1024xf32>
    %4 = arith.truncf %3 : vector<8x1024xf32> to vector<8x1024xbf16>
    %c0_2 = arith.constant 0 : index
    %c0_3 = arith.constant 0 : index
    %5 = vector.load %arg7[%c0_2, %c0_3] : memref<8x256xf32, #tpu.memory_space<vmem>>, vector<8x256xf32>
    %c0_4 = arith.constant 0 : index
    %c0_5 = arith.constant 0 : index
    %6 = vector.load %arg3[%c0_4, %c0_5] : memref<1024x256xbf16, #tpu.memory_space<vmem>>, vector<1024x256xbf16>
    %cst = arith.constant dense<0.000000e+00> : vector<8x256xf32>
    %7 = tpu.matmul %4, %6, %cst {dimension_numbers = #tpu.dot_dimension_numbers<[1], [0], [0], [1], [0, 0, 1, 1], [], []>} : vector<8x1024xbf16>, vector<1024x256xbf16>, vector<8x256xf32> -> vector<8x256xf32>
    %8 = arith.addf %5, %7 : vector<8x256xf32>
    %c0_6 = arith.constant 0 : index
    %c0_7 = arith.constant 0 : index
    %9 = vector.load %arg7[%c0_6, %c0_7] : memref<8x256xf32, #tpu.memory_space<vmem>>, vector<8x256xf32>
    tpu.vector_store %arg7[%c0_6, %c0_7], %8 {strides = array<i32>} : memref<8x256xf32, #tpu.memory_space<vmem>>, vector<8x256xf32>,
    %c0_i32_8 = arith.constant 0 : i32
    %10 = arith.cmpi eq, %arg1, %c0_i32_8 : i32
    %11 = arith.extui %10 : i1 to i32
    %c0_i32_9 = arith.constant 0 : i32
    %12 = arith.cmpi ne, %11, %c0_i32_9 : i32
    scf.if %12 {
      %c0_10 = arith.constant 0 : index
      %c0_11 = arith.constant 0 : index
      %13 = vector.load %arg7[%c0_10, %c0_11] : memref<8x256xf32, #tpu.memory_space<vmem>>, vector<8x256xf32>
      %c0_12 = arith.constant 0 : index
      %c0_13 = arith.constant 0 : index
      %14 = vector.load %arg4[%c0_12, %c0_13] : memref<1x256xf32, #tpu.memory_space<vmem>>, vector<1x256xf32>
      %15 = vector.broadcast %14 : vector<1x256xf32> to vector<8x256xf32>
      %16 = arith.addf %13, %15 : vector<8x256xf32>
      %17 = vector.extract_strided_slice %16 {offsets = [0, 0], sizes = [8, 9], strides = [1, 1]} : vector<8x256xf32> to vector<8x9xf32>
      %c0_14 = arith.constant 0 : index
      %c0_15 = arith.constant 0 : index
      %18 = vector.load %arg5[%c0_14, %c0_15] : memref<8x9xf32, #tpu.memory_space<vmem>>, vector<8x9xf32>
      tpu.vector_store %arg5[%c0_14, %c0_15], %17 {strides = array<i32>} : memref<8x9xf32, #tpu.memory_space<vmem>>, vector<8x9xf32>,
      %19 = vector.extract_strided_slice %16 {offsets = [0, 128], sizes = [8, 32], strides = [1, 1]} : vector<8x256xf32> to vector<8x32xf32>
      %c0_16 = arith.constant 0 : index
      %c0_17 = arith.constant 0 : index
      %20 = vector.load %arg6[%c0_16, %c0_17] : memref<8x32xf32, #tpu.memory_space<vmem>>, vector<8x32xf32>
      tpu.vector_store %arg6[%c0_16, %c0_17], %19 {strides = array<i32>} : memref<8x32xf32, #tpu.memory_space<vmem>>, vector<8x32xf32>,
    } else {
    }
    return
  }
  func.func @transform_0(%arg0: i32, %arg1: i32) -> (i32, i32) {
    %c0_i32 = arith.constant 0 : i32
    return %arg0, %arg1 : i32, i32
  }
  func.func @transform_1(%arg0: i32, %arg1: i32) -> (i32, i32) {
    %c0_i32 = arith.constant 0 : i32
    %c0_i32_0 = arith.constant 0 : i32
    return %arg1, %c0_i32 : i32, i32
  }
  func.func @transform_2(%arg0: i32, %arg1: i32) -> (i32, i32) {
    %c0_i32 = arith.constant 0 : i32
    %c0_i32_0 = arith.constant 0 : i32
    %c0_i32_1 = arith.constant 0 : i32
    return %c0_i32, %c0_i32_0 : i32, i32
  }
  func.func @transform_3(%arg0: i32, %arg1: i32) -> (i32, i32) {
    %c0_i32 = arith.constant 0 : i32
    %c0_i32_0 = arith.constant 0 : i32
    return %arg0, %c0_i32 : i32, i32
  }
  func.func @transform_4(%arg0: i32, %arg1: i32) -> (i32, i32) {
    %c0_i32 = arith.constant 0 : i32
    %c0_i32_0 = arith.constant 0 : i32
    return %arg0, %c0_i32 : i32, i32
  }
}

</mosaic_0001>

<llo_original>
// kernel: forward.1
$region0: #{forward.1}
  #allocation0 [shape = 'u32[]', space=smem, size = 0x4, offset = 0x4, fixed_abs, tag = 'smem constant byte address 0x4 - core index']
  #allocation1 [shape = 'u32[72,128]{1,0:T(1,128)}', space=vmem, size = 0x9000, scoped, tag = 'internal scratch']
  #allocation2 [shape = 'f32[8,256]{1,0:T(8,128)}', space=vmem, size = 0x2000, scoped, tag = 'scratch operand']
  %s0 = inlined_call_operand.vmem [shape: f32[2,1024], index: 0, kind: input, shape index: {}]
  %s1 = inlined_call_operand.hbm [shape: bf16[1024,256], index: 1, kind: input, shape index: {}]
  %s2 = inlined_call_operand.vmem [shape: f32[1,256], index: 2, kind: input, shape index: {}]
  %s3 = inlined_call_operand.hbm [shape: f32[2,9], index: 3, kind: output, shape index: {0}]
  %s4 = inlined_call_operand.hbm [shape: f32[2,32], index: 4, kind: output, shape index: {1}]
  %5 = xla_tuple %s3, %s4
  %s6 = sld [smem:[#allocation0]]
  $region42: #{forward.1} parent=0
    _
  %s8 = ssub.s32 1, %s6
  %s9 = scalar_select 0, %s8, %s6
  $region1: #{forward.1} parent=0
    #allocation3 [shape = 'u8[524288]{0}', space=vmem, size = 0x80000, scoped, tag = 'input window, operand 1, single buffered']
    #allocation4 [shape = 's32[1]{0}', space=sflag, size = 0x4, scoped, tag = 'scoped memory for forward.1']
    #allocation5 [shape = 's32[1]{0}', space=sflag, size = 0x4, scoped, tag = 'scoped memory for forward.1']
    #allocation6 [shape = 'u8[4096]{0}', space=vmem, size = 0x1000, scoped, tag = 'output window, operand 0, single buffered']
    #allocation7 [shape = 'u8[4096]{0}', space=vmem, size = 0x1000, scoped, tag = 'output window, operand 1, single buffered']
    #allocation8 [shape = 's32[1]{0}', space=sflag, size = 0x4, scoped, tag = 'scoped memory for forward.1']
    %10 = vsyncpa [#allocation4], 0
    %11 = vsyncpa [#allocation5], 0
    %12 = vsyncpa [#allocation8], 0
    // Predicated region
    $region2: #{forward.1} parent=1 // pred_check
      _
    $region3: #{forward.1} parent=1 // pred_check_branch
      %14 = sbr.rel (0) target = $region5
    $region4: #{forward.1} parent=1 // pred_region
      _
    $region5: #{forward.1} parent=1 // pred_fallthru
      _
    // Predicated region
    $region6: #{forward.1} parent=1 // pred_check
      _
    $region7: #{forward.1} parent=1 // pred_check_branch
      %16 = sbr.rel (0) target = $region9
    $region8: #{forward.1} parent=1 // pred_region
      %18 = vsyncadd [#allocation4], 0
      %s19 = sshll.u32 %s1, 4
      %s20 = int_to_ptr.hbm [resolvable:$true] %s19
      %s21 = sshll.u32 [#allocation3], 4
      %s22 = int_to_ptr.vmem [resolvable:$true] %s21
      %27 = dma.hbm_to_vmem [thread:$0]  %s20, 16384, %s22, [#allocation4], 128, 128, 8
    $region9: #{forward.1} parent=1 // pred_fallthru
      _
    // Predicated region
    $region10: #{forward.1} parent=1 // pred_check
      _
    $region11: #{forward.1} parent=1 // pred_check_branch
      %29 = sbr.rel (0) target = $region13
    $region12: #{forward.1} parent=1 // pred_region
      _
    $region13: #{forward.1} parent=1 // pred_fallthru
      _
    // Predicated region
    $region14: #{forward.1} parent=1 // pred_check
      _
    $region15: #{forward.1} parent=1 // pred_check_branch
      %31 = sbr.rel (0) target = $region17
    $region16: #{forward.1} parent=1 // pred_region
      %33 = dma.done [#allocation4], 16384
    $region17: #{forward.1} parent=1 // pred_fallthru
      _
    %p34 = scmp.eq.s32.totalorder 0, 0
    // Predicated region
    $region18: #{forward.1} parent=1 // pred_check
      %p35 = pneg %p34
    $region19: #{forward.1} parent=1 // pred_check_branch
      %37 = sbr.rel (%p35) target = $region21
    $region20: #{forward.1} parent=1 // pred_region
      %38 = vst [vmem:[#allocation2] sm:$0xff] 0.0
      %39 = vst [vmem:[#allocation2 + $0x8] sm:$0xff] 0.0
    $region21: #{forward.1} parent=1 // pred_fallthru
      _
    %v40 = vld [vmem:[%s0] sm:$0xff]
    %v41 = vld [vmem:[%s0 + $0x8] sm:$0xff]
    %v42 = vld [vmem:[%s0 + $0x10] sm:$0xff]
    %v43 = vld [vmem:[%s0 + $0x18] sm:$0xff]
    %v44 = vld [vmem:[%s0 + $0x20] sm:$0xff]
    %v45 = vld [vmem:[%s0 + $0x28] sm:$0xff]
    %v46 = vld [vmem:[%s0 + $0x30] sm:$0xff]
    %v47 = vld [vmem:[%s0 + $0x38] sm:$0xff]
    %56 = vst [vmem:[#allocation1] ss:$4 sm:$0xff] %v40
    %s57 = scalar_lea.vmem [#allocation1], 1
    %58 = vst [vmem:[%s57] ss:$4 sm:$0xff] %v42
    %s59 = scalar_lea.vmem [#allocation1], 2
    %60 = vst [vmem:[%s59] ss:$4 sm:$0xff] %v44
    %s61 = scalar_lea.vmem [#allocation1], 3
    %62 = vst [vmem:[%s61] ss:$4 sm:$0xff] %v46
    %s63 = scalar_lea.vmem [#allocation1], 32
    %64 = vst [vmem:[%s63] ss:$4 sm:$0xff] %v41
    %s65 = scalar_lea.vmem [#allocation1], 33
    %66 = vst [vmem:[%s65] ss:$4 sm:$0xff] %v43
    %s67 = scalar_lea.vmem [#allocation1], 34
    %68 = vst [vmem:[%s67] ss:$4 sm:$0xff] %v45
    %s69 = scalar_lea.vmem [#allocation1], 35
    %70 = vst [vmem:[%s69] ss:$4 sm:$0xff] %v47
    %v71 = vld.sshfl [vmem:[#allocation1] sm:$0xff pattern:$0x73625140]
    %v72 = vld.sshfl [vmem:[#allocation1 + $0x8] sm:$0xff pattern:$0x73625140]
    %v73 = vld.sshfl [vmem:[#allocation1 + $0x10] sm:$0xff pattern:$0x73625140]
    %v74 = vld.sshfl [vmem:[#allocation1 + $0x18] sm:$0xff pattern:$0x73625140]
    %v75 = vld.sshfl [vmem:[#allocation1 + $0x20] sm:$0xff pattern:$0x73625140]
    %v76 = vld.sshfl [vmem:[#allocation1 + $0x28] sm:$0xff pattern:$0x73625140]
    %v77 = vld.sshfl [vmem:[#allocation1 + $0x30] sm:$0xff pattern:$0x73625140]
    %v78 = vld.sshfl [vmem:[#allocation1 + $0x38] sm:$0xff pattern:$0x73625140]
    %v87 = vpack.c.bf16 %v71, %v71
    %v88 = vpack.c.bf16 %v72, %v72
    %v89 = vpack.c.bf16 %v73, %v73
    %v90 = vpack.c.bf16 %v74, %v74
    %v91 = vpack.c.bf16 %v75, %v75
    %v92 = vpack.c.bf16 %v76, %v76
    %v93 = vpack.c.bf16 %v77, %v77
    %v94 = vpack.c.bf16 %v78, %v78
    %v95 = vld [vmem:[#allocation2] sm:$0xff]
    %v96 = vld [vmem:[#allocation2 + $0x8] sm:$0xff]
    %v97 = vld [vmem:[#allocation3] sm:$0xff]
    %v98 = vld [vmem:[#allocation3 + $0x8] sm:$0xff]
    %v99 = vld [vmem:[#allocation3 + $0x10] sm:$0xff]
    %v100 = vld [vmem:[#allocation3 + $0x18] sm:$0xff]
    %v101 = vld [vmem:[#allocation3 + $0x20] sm:$0xff]
    %v102 = vld [vmem:[#allocation3 + $0x28] sm:$0xff]
    %v103 = vld [vmem:[#allocation3 + $0x30] sm:$0xff]
    %v104 = vld [vmem:[#allocation3 + $0x38] sm:$0xff]
    %v105 = vld [vmem:[#allocation3 + $0x40] sm:$0xff]
    %v106 = vld [vmem:[#allocation3 + $0x48] sm:$0xff]
    %v107 = vld [vmem:[#allocation3 + $0x50] sm:$0xff]
    %v108 = vld [vmem:[#allocation3 + $0x58] sm:$0xff]
    %v109 = vld [vmem:[#allocation3 + $0x60] sm:$0xff]
    %v110 = vld [vmem:[#allocation3 + $0x68] sm:$0xff]
    %v111 = vld [vmem:[#allocation3 + $0x70] sm:$0xff]
    %v112 = vld [vmem:[#allocation3 + $0x78] sm:$0xff]
    %v113 = vld [vmem:[#allocation3 + $0x80] sm:$0xff]
    %v114 = vld [vmem:[#allocation3 + $0x88] sm:$0xff]
    %v115 = vld [vmem:[#allocation3 + $0x90] sm:$0xff]
    %v116 = vld [vmem:[#allocation3 + $0x98] sm:$0xff]
    %v117 = vld [vmem:[#allocation3 + $0xa0] sm:$0xff]
    %v118 = vld [vmem:[#allocation3 + $0xa8] sm:$0xff]
    %v119 = vld [vmem:[#allocation3 + $0xb0] sm:$0xff]
    %v120 = vld [vmem:[#allocation3 + $0xb8] sm:$0xff]
    %v121 = vld [vmem:[#allocation3 + $0xc0] sm:$0xff]
    %v122 = vld [vmem:[#allocation3 + $0xc8] sm:$0xff]
    %v123 = vld [vmem:[#allocation3 + $0xd0] sm:$0xff]
    %v124 = vld [vmem:[#allocation3 + $0xd8] sm:$0xff]
    %v125 = vld [vmem:[#allocation3 + $0xe0] sm:$0xff]
    %v126 = vld [vmem:[#allocation3 + $0xe8] sm:$0xff]
    %v127 = vld [vmem:[#allocation3 + $0xf0] sm:$0xff]
    %v128 = vld [vmem:[#allocation3 + $0xf8] sm:$0xff]
    %v129 = vld [vmem:[#allocation3 + $0x100] sm:$0xff]
    %v130 = vld [vmem:[#allocation3 + $0x108] sm:$0xff]
    %v131 = vld [vmem:[#allocation3 + $0x110] sm:$0xff]
    %v132 = vld [vmem:[#allocation3 + $0x118] sm:$0xff]
    %v133 = vld [vmem:[#allocation3 + $0x120] sm:$0xff]
    %v134 = vld [vmem:[#allocation3 + $0x128] sm:$0xff]
    %v135 = vld [vmem:[#allocation3 + $0x130] sm:$0xff]
    %v136 = vld [vmem:[#allocation3 + $0x138] sm:$0xff]
    %v137 = vld [vmem:[#allocation3 + $0x140] sm:$0xff]
    %v138 = vld [vmem:[#allocation3 + $0x148] sm:$0xff]
    %v139 = vld [vmem:[#allocation3 + $0x150] sm:$0xff]
    %v140 = vld [vmem:[#allocation3 + $0x158] sm:$0xff]
    %v141 = vld [vmem:[#allocation3 + $0x160] sm:$0xff]
    %v142 = vld [vmem:[#allocation3 + $0x168] sm:$0xff]
    %v143 = vld [vmem:[#allocation3 + $0x170] sm:$0xff]
    %v144 = vld [vmem:[#allocation3 + $0x178] sm:$0xff]
    %v145 = vld [vmem:[#allocation3 + $0x180] sm:$0xff]
    %v146 = vld [vmem:[#allocation3 + $0x188] sm:$0xff]
    %v147 = vld [vmem:[#allocation3 + $0x190] sm:$0xff]
    %v148 = vld [vmem:[#allocation3 + $0x198] sm:$0xff]
    %v149 = vld [vmem:[#allocation3 + $0x1a0] sm:$0xff]
    %v150 = vld [vmem:[#allocation3 + $0x1a8] sm:$0xff]
    %v151 = vld [vmem:[#allocation3 + $0x1b0] sm:$0xff]
    %v152 = vld [vmem:[#allocation3 + $0x1b8] sm:$0xff]
    %v153 = vld [vmem:[#allocation3 + $0x1c0] sm:$0xff]
    %v154 = vld [vmem:[#allocation3 + $0x1c8] sm:$0xff]
    %v155 = vld [vmem:[#allocation3 + $0x1d0] sm:$0xff]
    %v156 = vld [vmem:[#allocation3 + $0x1d8] sm:$0xff]
    %v157 = vld [vmem:[#allocation3 + $0x1e0] sm:$0xff]
    %v158 = vld [vmem:[#allocation3 + $0x1e8] sm:$0xff]
    %v159 = vld [vmem:[#allocation3 + $0x1f0] sm:$0xff]
    %v160 = vld [vmem:[#allocation3 + $0x1f8] sm:$0xff]
    %v161 = vld [vmem:[#allocation3 + $0x200] sm:$0xff]
    %v162 = vld [vmem:[#allocation3 + $0x208] sm:$0xff]
    %v163 = vld [vmem:[#allocation3 + $0x210] sm:$0xff]
    %v164 = vld [vmem:[#allocation3 + $0x218] sm:$0xff]
    %v165 = vld [vmem:[#allocation3 + $0x220] sm:$0xff]
    %v166 = vld [vmem:[#allocation3 + $0x228] sm:$0xff]
    %v167 = vld [vmem:[#allocation3 + $0x230] sm:$0xff]
    %v168 = vld [vmem:[#allocation3 + $0x238] sm:$0xff]
    %v169 = vld [vmem:[#allocation3 + $0x240] sm:$0xff]
    %v170 = vld [vmem:[#allocation3 + $0x248] sm:$0xff]
    %v171 = vld [vmem:[#allocation3 + $0x250] sm:$0xff]
    %v172 = vld [vmem:[#allocation3 + $0x258] sm:$0xff]
    %v173 = vld [vmem:[#allocation3 + $0x260] sm:$0xff]
    %v174 = vld [vmem:[#allocation3 + $0x268] sm:$0xff]
    %v175 = vld [vmem:[#allocation3 + $0x270] sm:$0xff]
    %v176 = vld [vmem:[#allocation3 + $0x278] sm:$0xff]
    %v177 = vld [vmem:[#allocation3 + $0x280] sm:$0xff]
    %v178 = vld [vmem:[#allocation3 + $0x288] sm:$0xff]
    %v179 = vld [vmem:[#allocation3 + $0x290] sm:$0xff]
    %v180 = vld [vmem:[#allocation3 + $0x298] sm:$0xff]
    %v181 = vld [vmem:[#allocation3 + $0x2a0] sm:$0xff]
    %v182 = vld [vmem:[#allocation3 + $0x2a8] sm:$0xff]
    %v183 = vld [vmem:[#allocation3 + $0x2b0] sm:$0xff]
    %v184 = vld [vmem:[#allocation3 + $0x2b8] sm:$0xff]
    %v185 = vld [vmem:[#allocation3 + $0x2c0] sm:$0xff]
    %v186 = vld [vmem:[#allocation3 + $0x2c8] sm:$0xff]
    %v187 = vld [vmem:[#allocation3 + $0x2d0] sm:$0xff]
    %v188 = vld [vmem:[#allocation3 + $0x2d8] sm:$0xff]
    %v189 = vld [vmem:[#allocation3 + $0x2e0] sm:$0xff]
    %v190 = vld [vmem:[#allocation3 + $0x2e8] sm:$0xff]
    %v191 = vld [vmem:[#allocation3 + $0x2f0] sm:$0xff]
    %v192 = vld [vmem:[#allocation3 + $0x2f8] sm:$0xff]
    %v193 = vld [vmem:[#allocation3 + $0x300] sm:$0xff]
    %v194 = vld [vmem:[#allocation3 + $0x308] sm:$0xff]
    %v195 = vld [vmem:[#allocation3 + $0x310] sm:$0xff]
    %v196 = vld [vmem:[#allocation3 + $0x318] sm:$0xff]
    %v197 = vld [vmem:[#allocation3 + $0x320] sm:$0xff]
    %v198 = vld [vmem:[#allocation3 + $0x328] sm:$0xff]
    %v199 = vld [vmem:[#allocation3 + $0x330] sm:$0xff]
    %v200 = vld [vmem:[#allocation3 + $0x338] sm:$0xff]
    %v201 = vld [vmem:[#allocation3 + $0x340] sm:$0xff]
    %v202 = vld [vmem:[#allocation3 + $0x348] sm:$0xff]
    %v203 = vld [vmem:[#allocation3 + $0x350] sm:$0xff]
    %v204 = vld [vmem:[#allocation3 + $0x358] sm:$0xff]
    %v205 = vld [vmem:[#allocation3 + $0x360] sm:$0xff]
    %v206 = vld [vmem:[#allocation3 + $0x368] sm:$0xff]
    %v207 = vld [vmem:[#allocation3 + $0x370] sm:$0xff]
    %v208 = vld [vmem:[#allocation3 + $0x378] sm:$0xff]
    %v209 = vld [vmem:[#allocation3 + $0x380] sm:$0xff]
    %v210 = vld [vmem:[#allocation3 + $0x388] sm:$0xff]
    %v211 = vld [vmem:[#allocation3 + $0x390] sm:$0xff]
    %v212 = vld [vmem:[#allocation3 + $0x398] sm:$0xff]
    %v213 = vld [vmem:[#allocation3 + $0x3a0] sm:$0xff]
    %v214 = vld [vmem:[#allocation3 + $0x3a8] sm:$0xff]
    %v215 = vld [vmem:[#allocation3 + $0x3b0] sm:$0xff]
    %v216 = vld [vmem:[#allocation3 + $0x3b8] sm:$0xff]
    %v217 = vld [vmem:[#allocation3 + $0x3c0] sm:$0xff]
    %v218 = vld [vmem:[#allocation3 + $0x3c8] sm:$0xff]
    %v219 = vld [vmem:[#allocation3 + $0x3d0] sm:$0xff]
    %v220 = vld [vmem:[#allocation3 + $0x3d8] sm:$0xff]
    %v221 = vld [vmem:[#allocation3 + $0x3e0] sm:$0xff]
    %v222 = vld [vmem:[#allocation3 + $0x3e8] sm:$0xff]
    %v223 = vld [vmem:[#allocation3 + $0x3f0] sm:$0xff]
    %v224 = vld [vmem:[#allocation3 + $0x3f8] sm:$0xff]
    %v353 = vunpack.c.l.b16 %v97
    %v354 = vunpack.c.h.b16 %v97
    %v355 = vunpack.c.l.b16 %v98
    %v356 = vunpack.c.h.b16 %v98
    %v357 = vunpack.c.l.b16 %v99
    %v358 = vunpack.c.h.b16 %v99
    %v359 = vunpack.c.l.b16 %v100
    %v360 = vunpack.c.h.b16 %v100
    %v361 = vunpack.c.l.b16 %v101
    %v362 = vunpack.c.h.b16 %v101
    %v363 = vunpack.c.l.b16 %v102
    %v364 = vunpack.c.h.b16 %v102
    %v365 = vunpack.c.l.b16 %v103
    %v366 = vunpack.c.h.b16 %v103
    %v367 = vunpack.c.l.b16 %v104
    %v368 = vunpack.c.h.b16 %v104
    %v369 = vunpack.c.l.b16 %v105
    %v370 = vunpack.c.h.b16 %v105
    %v371 = vunpack.c.l.b16 %v106
    %v372 = vunpack.c.h.b16 %v106
    %v373 = vunpack.c.l.b16 %v107
    %v374 = vunpack.c.h.b16 %v107
    %v375 = vunpack.c.l.b16 %v108
    %v376 = vunpack.c.h.b16 %v108
    %v377 = vunpack.c.l.b16 %v109
    %v378 = vunpack.c.h.b16 %v109
    %v379 = vunpack.c.l.b16 %v110
    %v380 = vunpack.c.h.b16 %v110
    %v381 = vunpack.c.l.b16 %v111
    %v382 = vunpack.c.h.b16 %v111
    %v383 = vunpack.c.l.b16 %v112
    %v384 = vunpack.c.h.b16 %v112
    %v385 = vunpack.c.l.b16 %v113
    %v386 = vunpack.c.h.b16 %v113
    %v387 = vunpack.c.l.b16 %v114
    %v388 = vunpack.c.h.b16 %v114
    %v389 = vunpack.c.l.b16 %v115
    %v390 = vunpack.c.h.b16 %v115
    %v391 = vunpack.c.l.b16 %v116
    %v392 = vunpack.c.h.b16 %v116
    %v393 = vunpack.c.l.b16 %v117
    %v394 = vunpack.c.h.b16 %v117
    %v395 = vunpack.c.l.b16 %v118
    %v396 = vunpack.c.h.b16 %v118
    %v397 = vunpack.c.l.b16 %v119
    %v398 = vunpack.c.h.b16 %v119
    %v399 = vunpack.c.l.b16 %v120
    %v400 = vunpack.c.h.b16 %v120
    %v401 = vunpack.c.l.b16 %v121
    %v402 = vunpack.c.h.b16 %v121
    %v403 = vunpack.c.l.b16 %v122
    %v404 = vunpack.c.h.b16 %v122
    %v405 = vunpack.c.l.b16 %v123
    %v406 = vunpack.c.h.b16 %v123
    %v407 = vunpack.c.l.b16 %v124
    %v408 = vunpack.c.h.b16 %v124
    %v409 = vunpack.c.l.b16 %v125
    %v410 = vunpack.c.h.b16 %v125
    %v411 = vunpack.c.l.b16 %v126
    %v412 = vunpack.c.h.b16 %v126
    %v413 = vunpack.c.l.b16 %v127
    %v414 = vunpack.c.h.b16 %v127
    %v415 = vunpack.c.l.b16 %v128
    %v416 = vunpack.c.h.b16 %v128
    %v417 = vunpack.c.l.b16 %v129
    %v418 = vunpack.c.h.b16 %v129
    %v419 = vunpack.c.l.b16 %v130
    %v420 = vunpack.c.h.b16 %v130
    %v421 = vunpack.c.l.b16 %v131
    %v422 = vunpack.c.h.b16 %v131
    %v423 = vunpack.c.l.b16 %v132
    %v424 = vunpack.c.h.b16 %v132
    %v425 = vunpack.c.l.b16 %v133
    %v426 = vunpack.c.h.b16 %v133
    %v427 = vunpack.c.l.b16 %v134
    %v428 = vunpack.c.h.b16 %v134
    %v429 = vunpack.c.l.b16 %v135
    %v430 = vunpack.c.h.b16 %v135
    %v431 = vunpack.c.l.b16 %v136
    %v432 = vunpack.c.h.b16 %v136
    %v433 = vunpack.c.l.b16 %v137
    %v434 = vunpack.c.h.b16 %v137
    %v435 = vunpack.c.l.b16 %v138
    %v436 = vunpack.c.h.b16 %v138
    %v437 = vunpack.c.l.b16 %v139
    %v438 = vunpack.c.h.b16 %v139
    %v439 = vunpack.c.l.b16 %v140
    %v440 = vunpack.c.h.b16 %v140
    %v441 = vunpack.c.l.b16 %v141
    %v442 = vunpack.c.h.b16 %v141
    %v443 = vunpack.c.l.b16 %v142
    %v444 = vunpack.c.h.b16 %v142
    %v445 = vunpack.c.l.b16 %v143
    %v446 = vunpack.c.h.b16 %v143
    %v447 = vunpack.c.l.b16 %v144
    %v448 = vunpack.c.h.b16 %v144
    %v449 = vunpack.c.l.b16 %v145
    %v450 = vunpack.c.h.b16 %v145
    %v451 = vunpack.c.l.b16 %v146
    %v452 = vunpack.c.h.b16 %v146
    %v453 = vunpack.c.l.b16 %v147
    %v454 = vunpack.c.h.b16 %v147
    %v455 = vunpack.c.l.b16 %v148
    %v456 = vunpack.c.h.b16 %v148
    %v457 = vunpack.c.l.b16 %v149
    %v458 = vunpack.c.h.b16 %v149
    %v459 = vunpack.c.l.b16 %v150
    %v460 = vunpack.c.h.b16 %v150
    %v461 = vunpack.c.l.b16 %v151
    %v462 = vunpack.c.h.b16 %v151
    %v463 = vunpack.c.l.b16 %v152
    %v464 = vunpack.c.h.b16 %v152
    %v465 = vunpack.c.l.b16 %v153
    %v466 = vunpack.c.h.b16 %v153
    %v467 = vunpack.c.l.b16 %v154
    %v468 = vunpack.c.h.b16 %v154
    %v469 = vunpack.c.l.b16 %v155
    %v470 = vunpack.c.h.b16 %v155
    %v471 = vunpack.c.l.b16 %v156
    %v472 = vunpack.c.h.b16 %v156
    %v473 = vunpack.c.l.b16 %v157
    %v474 = vunpack.c.h.b16 %v157
    %v475 = vunpack.c.l.b16 %v158
    %v476 = vunpack.c.h.b16 %v158
    %v477 = vunpack.c.l.b16 %v159
    %v478 = vunpack.c.h.b16 %v159
    %v479 = vunpack.c.l.b16 %v160
    %v480 = vunpack.c.h.b16 %v160
    %v481 = vunpack.c.l.b16 %v161
    %v482 = vunpack.c.h.b16 %v161
    %v483 = vunpack.c.l.b16 %v162
    %v484 = vunpack.c.h.b16 %v162
    %v485 = vunpack.c.l.b16 %v163
    %v486 = vunpack.c.h.b16 %v163
    %v487 = vunpack.c.l.b16 %v164
    %v488 = vunpack.c.h.b16 %v164
    %v489 = vunpack.c.l.b16 %v165
    %v490 = vunpack.c.h.b16 %v165
    %v491 = vunpack.c.l.b16 %v166
    %v492 = vunpack.c.h.b16 %v166
    %v493 = vunpack.c.l.b16 %v167
    %v494 = vunpack.c.h.b16 %v167
    %v495 = vunpack.c.l.b16 %v168
    %v496 = vunpack.c.h.b16 %v168
    %v497 = vunpack.c.l.b16 %v169
    %v498 = vunpack.c.h.b16 %v169
    %v499 = vunpack.c.l.b16 %v170
    %v500 = vunpack.c.h.b16 %v170
    %v501 = vunpack.c.l.b16 %v171
    %v502 = vunpack.c.h.b16 %v171
    %v503 = vunpack.c.l.b16 %v172
    %v504 = vunpack.c.h.b16 %v172
    %v505 = vunpack.c.l.b16 %v173
    %v506 = vunpack.c.h.b16 %v173
    %v507 = vunpack.c.l.b16 %v174
    %v508 = vunpack.c.h.b16 %v174
    %v509 = vunpack.c.l.b16 %v175
    %v510 = vunpack.c.h.b16 %v175
    %v511 = vunpack.c.l.b16 %v176
    %v512 = vunpack.c.h.b16 %v176
    %v513 = vunpack.c.l.b16 %v177
    %v514 = vunpack.c.h.b16 %v177
    %v515 = vunpack.c.l.b16 %v178
    %v516 = vunpack.c.h.b16 %v178
    %v517 = vunpack.c.l.b16 %v179
    %v518 = vunpack.c.h.b16 %v179
    %v519 = vunpack.c.l.b16 %v180
    %v520 = vunpack.c.h.b16 %v180
    %v521 = vunpack.c.l.b16 %v181
    %v522 = vunpack.c.h.b16 %v181
    %v523 = vunpack.c.l.b16 %v182
    %v524 = vunpack.c.h.b16 %v182
    %v525 = vunpack.c.l.b16 %v183
    %v526 = vunpack.c.h.b16 %v183
    %v527 = vunpack.c.l.b16 %v184
    %v528 = vunpack.c.h.b16 %v184
    %v529 = vunpack.c.l.b16 %v185
    %v530 = vunpack.c.h.b16 %v185
    %v531 = vunpack.c.l.b16 %v186
    %v532 = vunpack.c.h.b16 %v186
    %v533 = vunpack.c.l.b16 %v187
    %v534 = vunpack.c.h.b16 %v187
    %v535 = vunpack.c.l.b16 %v188
    %v536 = vunpack.c.h.b16 %v188
    %v537 = vunpack.c.l.b16 %v189
    %v538 = vunpack.c.h.b16 %v189
    %v539 = vunpack.c.l.b16 %v190
    %v540 = vunpack.c.h.b16 %v190
    %v541 = vunpack.c.l.b16 %v191
    %v542 = vunpack.c.h.b16 %v191
    %v543 = vunpack.c.l.b16 %v192
    %v544 = vunpack.c.h.b16 %v192
    %v545 = vunpack.c.l.b16 %v193
    %v546 = vunpack.c.h.b16 %v193
    %v547 = vunpack.c.l.b16 %v194
    %v548 = vunpack.c.h.b16 %v194
    %v549 = vunpack.c.l.b16 %v195
    %v550 = vunpack.c.h.b16 %v195
    %v551 = vunpack.c.l.b16 %v196
    %v552 = vunpack.c.h.b16 %v196
    %v553 = vunpack.c.l.b16 %v197
    %v554 = vunpack.c.h.b16 %v197
    %v555 = vunpack.c.l.b16 %v198
    %v556 = vunpack.c.h.b16 %v198
    %v557 = vunpack.c.l.b16 %v199
    %v558 = vunpack.c.h.b16 %v199
    %v559 = vunpack.c.l.b16 %v200
    %v560 = vunpack.c.h.b16 %v200
    %v561 = vunpack.c.l.b16 %v201
    %v562 = vunpack.c.h.b16 %v201
    %v563 = vunpack.c.l.b16 %v202
    %v564 = vunpack.c.h.b16 %v202
    %v565 = vunpack.c.l.b16 %v203
    %v566 = vunpack.c.h.b16 %v203
    %v567 = vunpack.c.l.b16 %v204
    %v568 = vunpack.c.h.b16 %v204
    %v569 = vunpack.c.l.b16 %v205
    %v570 = vunpack.c.h.b16 %v205
    %v571 = vunpack.c.l.b16 %v206
    %v572 = vunpack.c.h.b16 %v206
    %v573 = vunpack.c.l.b16 %v207
    %v574 = vunpack.c.h.b16 %v207
    %v575 = vunpack.c.l.b16 %v208
    %v576 = vunpack.c.h.b16 %v208
    %v577 = vunpack.c.l.b16 %v209
    %v578 = vunpack.c.h.b16 %v209
    %v579 = vunpack.c.l.b16 %v210
    %v580 = vunpack.c.h.b16 %v210
    %v581 = vunpack.c.l.b16 %v211
    %v582 = vunpack.c.h.b16 %v211
    %v583 = vunpack.c.l.b16 %v212
    %v584 = vunpack.c.h.b16 %v212
    %v585 = vunpack.c.l.b16 %v213
    %v586 = vunpack.c.h.b16 %v213
    %v587 = vunpack.c.l.b16 %v214
    %v588 = vunpack.c.h.b16 %v214
    %v589 = vunpack.c.l.b16 %v215
    %v590 = vunpack.c.h.b16 %v215
    %v591 = vunpack.c.l.b16 %v216
    %v592 = vunpack.c.h.b16 %v216
    %v593 = vunpack.c.l.b16 %v217
    %v594 = vunpack.c.h.b16 %v217
    %v595 = vunpack.c.l.b16 %v218
    %v596 = vunpack.c.h.b16 %v218
    %v597 = vunpack.c.l.b16 %v219
    %v598 = vunpack.c.h.b16 %v219
    %v599 = vunpack.c.l.b16 %v220
    %v600 = vunpack.c.h.b16 %v220
    %v601 = vunpack.c.l.b16 %v221
    %v602 = vunpack.c.h.b16 %v221
    %v603 = vunpack.c.l.b16 %v222
    %v604 = vunpack.c.h.b16 %v222
    %v605 = vunpack.c.l.b16 %v223
    %v606 = vunpack.c.h.b16 %v223
    %v607 = vunpack.c.l.b16 %v224
    %v608 = vunpack.c.h.b16 %v224
    %v609 = vpack.c.b16 %v355, %v353
    %v610 = vpack.c.b16 %v356, %v354
    %v611 = vpack.c.b16 %v359, %v357
    %v612 = vpack.c.b16 %v360, %v358
    %v613 = vpack.c.b16 %v363, %v361
    %v614 = vpack.c.b16 %v364, %v362
    %v615 = vpack.c.b16 %v367, %v365
    %v616 = vpack.c.b16 %v368, %v366
    %v617 = vpack.c.b16 %v371, %v369
    %v618 = vpack.c.b16 %v372, %v370
    %v619 = vpack.c.b16 %v375, %v373
    %v620 = vpack.c.b16 %v376, %v374
    %v621 = vpack.c.b16 %v379, %v377
    %v622 = vpack.c.b16 %v380, %v378
    %v623 = vpack.c.b16 %v383, %v381
    %v624 = vpack.c.b16 %v384, %v382
    %v625 = vpack.c.b16 %v387, %v385
    %v626 = vpack.c.b16 %v388, %v386
    %v627 = vpack.c.b16 %v391, %v389
    %v628 = vpack.c.b16 %v392, %v390
    %v629 = vpack.c.b16 %v395, %v393
    %v630 = vpack.c.b16 %v396, %v394
    %v631 = vpack.c.b16 %v399, %v397
    %v632 = vpack.c.b16 %v400, %v398
    %v633 = vpack.c.b16 %v403, %v401
    %v634 = vpack.c.b16 %v404, %v402
    %v635 = vpack.c.b16 %v407, %v405
    %v636 = vpack.c.b16 %v408, %v406
    %v637 = vpack.c.b16 %v411, %v409
    %v638 = vpack.c.b16 %v412, %v410
    %v639 = vpack.c.b16 %v415, %v413
    %v640 = vpack.c.b16 %v416, %v414
    %v641 = vpack.c.b16 %v419, %v417
    %v642 = vpack.c.b16 %v420, %v418
    %v643 = vpack.c.b16 %v423, %v421
    %v644 = vpack.c.b16 %v424, %v422
    %v645 = vpack.c.b16 %v427, %v425
    %v646 = vpack.c.b16 %v428, %v426
    %v647 = vpack.c.b16 %v431, %v429
    %v648 = vpack.c.b16 %v432, %v430
    %v649 = vpack.c.b16 %v435, %v433
    %v650 = vpack.c.b16 %v436, %v434
    %v651 = vpack.c.b16 %v439, %v437
    %v652 = vpack.c.b16 %v440, %v438
    %v653 = vpack.c.b16 %v443, %v441
    %v654 = vpack.c.b16 %v444, %v442
    %v655 = vpack.c.b16 %v447, %v445
    %v656 = vpack.c.b16 %v448, %v446
    %v657 = vpack.c.b16 %v451, %v449
    %v658 = vpack.c.b16 %v452, %v450
    %v659 = vpack.c.b16 %v455, %v453
    %v660 = vpack.c.b16 %v456, %v454
    %v661 = vpack.c.b16 %v459, %v457
    %v662 = vpack.c.b16 %v460, %v458
    %v663 = vpack.c.b16 %v463, %v461
    %v664 = vpack.c.b16 %v464, %v462
    %v665 = vpack.c.b16 %v467, %v465
    %v666 = vpack.c.b16 %v468, %v466
    %v667 = vpack.c.b16 %v471, %v469
    %v668 = vpack.c.b16 %v472, %v470
    %v669 = vpack.c.b16 %v475, %v473
    %v670 = vpack.c.b16 %v476, %v474
    %v671 = vpack.c.b16 %v479, %v477
    %v672 = vpack.c.b16 %v480, %v478
    %v673 = vpack.c.b16 %v483, %v481
    %v674 = vpack.c.b16 %v484, %v482
    %v675 = vpack.c.b16 %v487, %v485
    %v676 = vpack.c.b16 %v488, %v486
    %v677 = vpack.c.b16 %v491, %v489
    %v678 = vpack.c.b16 %v492, %v490
    %v679 = vpack.c.b16 %v495, %v493
    %v680 = vpack.c.b16 %v496, %v494
    %v681 = vpack.c.b16 %v499, %v497
    %v682 = vpack.c.b16 %v500, %v498
    %v683 = vpack.c.b16 %v503, %v501
    %v684 = vpack.c.b16 %v504, %v502
    %v685 = vpack.c.b16 %v507, %v505
    %v686 = vpack.c.b16 %v508, %v506
    %v687 = vpack.c.b16 %v511, %v509
    %v688 = vpack.c.b16 %v512, %v510
    %v689 = vpack.c.b16 %v515, %v513
    %v690 = vpack.c.b16 %v516, %v514
    %v691 = vpack.c.b16 %v519, %v517
    %v692 = vpack.c.b16 %v520, %v518
    %v693 = vpack.c.b16 %v523, %v521
    %v694 = vpack.c.b16 %v524, %v522
    %v695 = vpack.c.b16 %v527, %v525
    %v696 = vpack.c.b16 %v528, %v526
    %v697 = vpack.c.b16 %v531, %v529
    %v698 = vpack.c.b16 %v532, %v530
    %v699 = vpack.c.b16 %v535, %v533
    %v700 = vpack.c.b16 %v536, %v534
    %v701 = vpack.c.b16 %v539, %v537
    %v702 = vpack.c.b16 %v540, %v538
    %v703 = vpack.c.b16 %v543, %v541
    %v704 = vpack.c.b16 %v544, %v542
    %v705 = vpack.c.b16 %v547, %v545
    %v706 = vpack.c.b16 %v548, %v546
    %v707 = vpack.c.b16 %v551, %v549
    %v708 = vpack.c.b16 %v552, %v550
    %v709 = vpack.c.b16 %v555, %v553
    %v710 = vpack.c.b16 %v556, %v554
    %v711 = vpack.c.b16 %v559, %v557
    %v712 = vpack.c.b16 %v560, %v558
    %v713 = vpack.c.b16 %v563, %v561
    %v714 = vpack.c.b16 %v564, %v562
    %v715 = vpack.c.b16 %v567, %v565
    %v716 = vpack.c.b16 %v568, %v566
    %v717 = vpack.c.b16 %v571, %v569
    %v718 = vpack.c.b16 %v572, %v570
    %v719 = vpack.c.b16 %v575, %v573
    %v720 = vpack.c.b16 %v576, %v574
    %v721 = vpack.c.b16 %v579, %v577
    %v722 = vpack.c.b16 %v580, %v578
    %v723 = vpack.c.b16 %v583, %v581
    %v724 = vpack.c.b16 %v584, %v582
    %v725 = vpack.c.b16 %v587, %v585
    %v726 = vpack.c.b16 %v588, %v586
    %v727 = vpack.c.b16 %v591, %v589
    %v728 = vpack.c.b16 %v592, %v590
    %v729 = vpack.c.b16 %v595, %v593
    %v730 = vpack.c.b16 %v596, %v594
    %v731 = vpack.c.b16 %v599, %v597
    %v732 = vpack.c.b16 %v600, %v598
    %v733 = vpack.c.b16 %v603, %v601
    %v734 = vpack.c.b16 %v604, %v602
    %v735 = vpack.c.b16 %v607, %v605
    %v736 = vpack.c.b16 %v608, %v606
    %865 = vmatpush.bf16.msra.mxu0 %v623
    %866 = vmatpush.bf16.msra.mxu0 %v621
    %867 = vmatpush.bf16.msra.mxu0 %v619
    %868 = vmatpush.bf16.msra.mxu0 %v617
    %869 = vmatpush.bf16.msra.mxu0 %v615
    %870 = vmatpush.bf16.msra.mxu0 %v613
    %871 = vmatpush.bf16.msra.mxu0 %v611
    %872 = vmatpush.bf16.msra.mxu0 %v609
    %873 = vmatmul.bf16.gmra.mxu0 %v87
    %v874 = vpop.f32.mrf.mxu0
    %v875 = vadd.f32 0.0, %v874
    %v876 = vpop.f32.mrf.mxu0
    %877 = vdwg.mxu0
    %878 = vmatpush.bf16.msra.mxu0 %v639
    %879 = vmatpush.bf16.msra.mxu0 %v637
    %880 = vmatpush.bf16.msra.mxu0 %v635
    %881 = vmatpush.bf16.msra.mxu0 %v633
    %882 = vmatpush.bf16.msra.mxu0 %v631
    %883 = vmatpush.bf16.msra.mxu0 %v629
    %884 = vmatpush.bf16.msra.mxu0 %v627
    %885 = vmatpush.bf16.msra.mxu0 %v625
    %886 = vmatmul.bf16.gmra.mxu0 %v88
    %v887 = vpop.f32.mrf.mxu0
    %v888 = vadd.f32 %v875, %v887
    %v889 = vpop.f32.mrf.mxu0
    %890 = vdwg.mxu0
    %891 = vmatpush.bf16.msra.mxu0 %v655
    %892 = vmatpush.bf16.msra.mxu0 %v653
    %893 = vmatpush.bf16.msra.mxu0 %v651
    %894 = vmatpush.bf16.msra.mxu0 %v649
    %895 = vmatpush.bf16.msra.mxu0 %v647
    %896 = vmatpush.bf16.msra.mxu0 %v645
    %897 = vmatpush.bf16.msra.mxu0 %v643
    %898 = vmatpush.bf16.msra.mxu0 %v641
    %899 = vmatmul.bf16.gmra.mxu0 %v89
    %v900 = vpop.f32.mrf.mxu0
    %v901 = vadd.f32 %v888, %v900
    %v902 = vpop.f32.mrf.mxu0
    %903 = vdwg.mxu0
    %904 = vmatpush.bf16.msra.mxu0 %v671
    %905 = vmatpush.bf16.msra.mxu0 %v669
    %906 = vmatpush.bf16.msra.mxu0 %v667
    %907 = vmatpush.bf16.msra.mxu0 %v665
    %908 = vmatpush.bf16.msra.mxu0 %v663
    %909 = vmatpush.bf16.msra.mxu0 %v661
    %910 = vmatpush.bf16.msra.mxu0 %v659
    %911 = vmatpush.bf16.msra.mxu0 %v657
    %912 = vmatmul.bf16.gmra.mxu0 %v90
    %v913 = vpop.f32.mrf.mxu0
    %v914 = vadd.f32 %v901, %v913
    %v915 = vpop.f32.mrf.mxu0
    %916 = vdwg.mxu0
    %917 = vmatpush.bf16.msra.mxu0 %v687
    %918 = vmatpush.bf16.msra.mxu0 %v685
    %919 = vmatpush.bf16.msra.mxu0 %v683
    %920 = vmatpush.bf16.msra.mxu0 %v681
    %921 = vmatpush.bf16.msra.mxu0 %v679
    %922 = vmatpush.bf16.msra.mxu0 %v677
    %923 = vmatpush.bf16.msra.mxu0 %v675
    %924 = vmatpush.bf16.msra.mxu0 %v673
    %925 = vmatmul.bf16.gmra.mxu0 %v91
    %v926 = vpop.f32.mrf.mxu0
    %v927 = vadd.f32 %v914, %v926
    %v928 = vpop.f32.mrf.mxu0
    %929 = vdwg.mxu0
    %930 = vmatpush.bf16.msra.mxu0 %v703
    %931 = vmatpush.bf16.msra.mxu0 %v701
    %932 = vmatpush.bf16.msra.mxu0 %v699
    %933 = vmatpush.bf16.msra.mxu0 %v697
    %934 = vmatpush.bf16.msra.mxu0 %v695
    %935 = vmatpush.bf16.msra.mxu0 %v693
    %936 = vmatpush.bf16.msra.mxu0 %v691
    %937 = vmatpush.bf16.msra.mxu0 %v689
    %938 = vmatmul.bf16.gmra.mxu0 %v92
    %v939 = vpop.f32.mrf.mxu0
    %v940 = vadd.f32 %v927, %v939
    %v941 = vpop.f32.mrf.mxu0
    %942 = vdwg.mxu0
    %943 = vmatpush.bf16.msra.mxu0 %v719
    %944 = vmatpush.bf16.msra.mxu0 %v717
    %945 = vmatpush.bf16.msra.mxu0 %v715
    %946 = vmatpush.bf16.msra.mxu0 %v713
    %947 = vmatpush.bf16.msra.mxu0 %v711
    %948 = vmatpush.bf16.msra.mxu0 %v709
    %949 = vmatpush.bf16.msra.mxu0 %v707
    %950 = vmatpush.bf16.msra.mxu0 %v705
    %951 = vmatmul.bf16.gmra.mxu0 %v93
    %v952 = vpop.f32.mrf.mxu0
    %v953 = vadd.f32 %v940, %v952
    %v954 = vpop.f32.mrf.mxu0
    %955 = vdwg.mxu0
    %956 = vmatpush.bf16.msra.mxu0 %v735
    %957 = vmatpush.bf16.msra.mxu0 %v733
    %958 = vmatpush.bf16.msra.mxu0 %v731
    %959 = vmatpush.bf16.msra.mxu0 %v729
    %960 = vmatpush.bf16.msra.mxu0 %v727
    %961 = vmatpush.bf16.msra.mxu0 %v725
    %962 = vmatpush.bf16.msra.mxu0 %v723
    %963 = vmatpush.bf16.msra.mxu0 %v721
    %964 = vmatmul.bf16.gmra.mxu0 %v94
    %v965 = vpop.f32.mrf.mxu0
    %v966 = vadd.f32 %v953, %v965
    %v967 = vpop.f32.mrf.mxu0
    %968 = vdwg.mxu0
    %969 = vmatpush.bf16.msra.mxu0 %v624
    %970 = vmatpush.bf16.msra.mxu0 %v622
    %971 = vmatpush.bf16.msra.mxu0 %v620
    %972 = vmatpush.bf16.msra.mxu0 %v618
    %973 = vmatpush.bf16.msra.mxu0 %v616
    %974 = vmatpush.bf16.msra.mxu0 %v614
    %975 = vmatpush.bf16.msra.mxu0 %v612
    %976 = vmatpush.bf16.msra.mxu0 %v610
    %977 = vmatmul.bf16.gmra.mxu0 %v87
    %v978 = vpop.f32.mrf.mxu0
    %v979 = vadd.f32 0.0, %v978
    %v980 = vpop.f32.mrf.mxu0
    %981 = vdwg.mxu0
    %982 = vmatpush.bf16.msra.mxu0 %v640
    %983 = vmatpush.bf16.msra.mxu0 %v638
    %984 = vmatpush.bf16.msra.mxu0 %v636
    %985 = vmatpush.bf16.msra.mxu0 %v634
    %986 = vmatpush.bf16.msra.mxu0 %v632
    %987 = vmatpush.bf16.msra.mxu0 %v630
    %988 = vmatpush.bf16.msra.mxu0 %v628
    %989 = vmatpush.bf16.msra.mxu0 %v626
    %990 = vmatmul.bf16.gmra.mxu0 %v88
    %v991 = vpop.f32.mrf.mxu0
    %v992 = vadd.f32 %v979, %v991
    %v993 = vpop.f32.mrf.mxu0
    %994 = vdwg.mxu0
    %995 = vmatpush.bf16.msra.mxu0 %v656
    %996 = vmatpush.bf16.msra.mxu0 %v654
    %997 = vmatpush.bf16.msra.mxu0 %v652
    %998 = vmatpush.bf16.msra.mxu0 %v650
    %999 = vmatpush.bf16.msra.mxu0 %v648
    %1000 = vmatpush.bf16.msra.mxu0 %v646
    %1001 = vmatpush.bf16.msra.mxu0 %v644
    %1002 = vmatpush.bf16.msra.mxu0 %v642
    %1003 = vmatmul.bf16.gmra.mxu0 %v89
    %v1004 = vpop.f32.mrf.mxu0
    %v1005 = vadd.f32 %v992, %v1004
    %v1006 = vpop.f32.mrf.mxu0
    %1007 = vdwg.mxu0
    %1008 = vmatpush.bf16.msra.mxu0 %v672
    %1009 = vmatpush.bf16.msra.mxu0 %v670
    %1010 = vmatpush.bf16.msra.mxu0 %v668
    %1011 = vmatpush.bf16.msra.mxu0 %v666
    %1012 = vmatpush.bf16.msra.mxu0 %v664
    %1013 = vmatpush.bf16.msra.mxu0 %v662
    %1014 = vmatpush.bf16.msra.mxu0 %v660
    %1015 = vmatpush.bf16.msra.mxu0 %v658
    %1016 = vmatmul.bf16.gmra.mxu0 %v90
    %v1017 = vpop.f32.mrf.mxu0
    %v1018 = vadd.f32 %v1005, %v1017
    %v1019 = vpop.f32.mrf.mxu0
    %1020 = vdwg.mxu0
    %1021 = vmatpush.bf16.msra.mxu0 %v688
    %1022 = vmatpush.bf16.msra.mxu0 %v686
    %1023 = vmatpush.bf16.msra.mxu0 %v684
    %1024 = vmatpush.bf16.msra.mxu0 %v682
    %1025 = vmatpush.bf16.msra.mxu0 %v680
    %1026 = vmatpush.bf16.msra.mxu0 %v678
    %1027 = vmatpush.bf16.msra.mxu0 %v676
    %1028 = vmatpush.bf16.msra.mxu0 %v674
    %1029 = vmatmul.bf16.gmra.mxu0 %v91
    %v1030 = vpop.f32.mrf.mxu0
    %v1031 = vadd.f32 %v1018, %v1030
    %v1032 = vpop.f32.mrf.mxu0
    %1033 = vdwg.mxu0
    %1034 = vmatpush.bf16.msra.mxu0 %v704
    %1035 = vmatpush.bf16.msra.mxu0 %v702
    %1036 = vmatpush.bf16.msra.mxu0 %v700
    %1037 = vmatpush.bf16.msra.mxu0 %v698
    %1038 = vmatpush.bf16.msra.mxu0 %v696
    %1039 = vmatpush.bf16.msra.mxu0 %v694
    %1040 = vmatpush.bf16.msra.mxu0 %v692
    %1041 = vmatpush.bf16.msra.mxu0 %v690
    %1042 = vmatmul.bf16.gmra.mxu0 %v92
    %v1043 = vpop.f32.mrf.mxu0
    %v1044 = vadd.f32 %v1031, %v1043
    %v1045 = vpop.f32.mrf.mxu0
    %1046 = vdwg.mxu0
    %1047 = vmatpush.bf16.msra.mxu0 %v720
    %1048 = vmatpush.bf16.msra.mxu0 %v718
    %1049 = vmatpush.bf16.msra.mxu0 %v716
    %1050 = vmatpush.bf16.msra.mxu0 %v714
    %1051 = vmatpush.bf16.msra.mxu0 %v712
    %1052 = vmatpush.bf16.msra.mxu0 %v710
    %1053 = vmatpush.bf16.msra.mxu0 %v708
    %1054 = vmatpush.bf16.msra.mxu0 %v706
    %1055 = vmatmul.bf16.gmra.mxu0 %v93
    %v1056 = vpop.f32.mrf.mxu0
    %v1057 = vadd.f32 %v1044, %v1056
    %v1058 = vpop.f32.mrf.mxu0
    %1059 = vdwg.mxu0
    %1060 = vmatpush.bf16.msra.mxu0 %v736
    %1061 = vmatpush.bf16.msra.mxu0 %v734
    %1062 = vmatpush.bf16.msra.mxu0 %v732
    %1063 = vmatpush.bf16.msra.mxu0 %v730
    %1064 = vmatpush.bf16.msra.mxu0 %v728
    %1065 = vmatpush.bf16.msra.mxu0 %v726
    %1066 = vmatpush.bf16.msra.mxu0 %v724
    %1067 = vmatpush.bf16.msra.mxu0 %v722
    %1068 = vmatmul.bf16.gmra.mxu0 %v94
    %v1069 = vpop.f32.mrf.mxu0
    %v1070 = vadd.f32 %v1057, %v1069
    %v1071 = vpop.f32.mrf.mxu0
    %1072 = vdwg.mxu0
    %v1073 = vadd.f32 %v95, %v966
    %v1074 = vadd.f32 %v96, %v1070
    %1075 = vst [vmem:[#allocation2] sm:$0xff] %v1073
    %1076 = vst [vmem:[#allocation2 + $0x8] sm:$0xff] %v1074
    // Predicated region
    $region22: #{forward.1} parent=1 // pred_check
      %p1077 = pneg %p34
    $region23: #{forward.1} parent=1 // pred_check_branch
      %1079 = sbr.rel (%p1077) target = $region25
    $region24: #{forward.1} parent=1 // pred_region
      %v1080 = vld [vmem:[#allocation2] sm:$0xff]
      %v1081 = vld [vmem:[#allocation2 + $0x8] sm:$0xff]
      %v1082 = vld [vmem:[%s2] sm:$0x3]
      %v1084 = vperm.slane %v1082, 0
      %v1085 = vperm.slane %v1082, 1
      %v1088 = vadd.f32 %v1080, %v1084
      %v1089 = vadd.f32 %v1081, %v1085
      %vm1090 = vcmask 72704
      %1091 = vst.msk [vmem:[#allocation6] sm:$0xff] %vm1090, %v1088
      %vm1092 = vcmask 261120
      %1093 = vst.msk [vmem:[#allocation7] sm:$0xff] %vm1092, %v1089
    $region25: #{forward.1} parent=1 // pred_fallthru
      _
    // Predicated region
    $region26: #{forward.1} parent=1 // pred_check
      _
    $region27: #{forward.1} parent=1 // pred_check_branch
      %1095 = sbr.rel (0) target = $region29
    $region28: #{forward.1} parent=1 // pred_region
      %1097 = vsyncadd [#allocation5], 96
      %s1098 = sshll.u32 [#allocation6], 4
      %s1099 = int_to_ptr.vmem [resolvable:$true] %s1098
      %s1100 = sshll.u32 %s3, 4
      %s1101 = int_to_ptr.hbm [resolvable:$true] %s1100
      %1106 = dma.vmem_to_hbm [thread:$0]  %s1099, 32, %s1101, [#allocation5], 32, 32, 2
    $region29: #{forward.1} parent=1 // pred_fallthru
      _
    // Predicated region
    $region30: #{forward.1} parent=1 // pred_check
      _
    $region31: #{forward.1} parent=1 // pred_check_branch
      %1108 = sbr.rel (0) target = $region33
    $region32: #{forward.1} parent=1 // pred_region
      %1110 = vsyncadd [#allocation8], 96
      %s1111 = sshll.u32 [#allocation7], 4
      %s1112 = int_to_ptr.vmem [resolvable:$true] %s1111
      %s1113 = sshll.u32 %s4, 4
      %s1114 = int_to_ptr.hbm [resolvable:$true] %s1113
      %1119 = dma.vmem_to_hbm [thread:$0]  %s1112, 32, %s1114, [#allocation8], 32, 32, 2
    $region33: #{forward.1} parent=1 // pred_fallthru
      _
    // Predicated region
    $region34: #{forward.1} parent=1 // pred_check
      _
    $region35: #{forward.1} parent=1 // pred_check_branch
      %1121 = sbr.rel (0) target = $region37
    $region36: #{forward.1} parent=1 // pred_region
      %1123 = dma.done [#allocation5], 128
    $region37: #{forward.1} parent=1 // pred_fallthru
      _
    // Predicated region
    $region38: #{forward.1} parent=1 // pred_check
      _
    $region39: #{forward.1} parent=1 // pred_check_branch
      %1125 = sbr.rel (0) target = $region41
    $region40: #{forward.1} parent=1 // pred_region
      %1127 = dma.done [#allocation8], 128
    $region41: #{forward.1} parent=1 // pred_fallthru
      _
    %1128 = vsyncpa [#allocation4], 1
    %1129 = vsyncpa [#allocation5], 1
    %1130 = vsyncpa [#allocation8], 1

</llo_original>
